<compile_context>
chip_gen: v5e
topology: v5e:2x2
jax: 0.10.0
libtpu: 0.0.40
codegen_flags: <defaults>
</compile_context>

<pallas_src>
import jax
import jax.numpy as jnp
from jax.experimental import pallas as pl
from jax.experimental.pallas import tpu as pltpu


def _round_up(x, m):
    return (x + m - 1) // m * m


def _block_bytes(shape, dtype_bytes):
    """Approximate VMEM footprint of one block, padded to the (8,128) tiling."""
    padded = list(shape)
    if len(padded) >= 2:
        padded[-2] = _round_up(padded[-2], 8)
    padded[-1] = _round_up(padded[-1], 128)
    n = 1
    for d in padded:
        n *= d
    return n * dtype_bytes


def _pick_batch_tile(B, S, H, *, hs_bytes_per_elem=2,
                     target_block_bytes=12 << 20, min_steps=4):
    """Largest multiple-of-8 divisor of B whose (tb, S, H) hidden-state block
    stays under `target_block_bytes` (double-buffered it is then ~2x that,
    which fits even v7x's 64 MiB VMEM with room for the other operands),
    preferring nb >= min_steps grid steps so double-buffering overlaps DMA
    with compute, and nb >= 2 so the "parallel" axis can shard over both v7x
    TensorCores.  Tiny batches fall back to a single whole-batch step."""
    cands = [d for d in range(8, B, 8) if B % d == 0]
    for want_steps in (min_steps, 2):
        for d in sorted(cands, reverse=True):
            if (d * S * H * hs_bytes_per_elem <= target_block_bytes
                    and B // d >= want_steps):
                return d
    if cands:
        return min(cands)
    return B


# ----------------------------- Pallas kernel -------------------------------

def vitbert_head_kernel(masks_ref, hs_ref, pool_ref, inv_ref, w_ref, b_ref,
                        out_ref):
    masks = masks_ref[...]          # (tb, 3, S) bf16 {0,1}: [tt==1, tt==2, att]
    hs = hs_ref[...]                # (tb, S, H) bf16 text hidden states
    pool = pool_ref[...]            # (tb, H)    f32  ViT pooled output

    # One batched MXU contraction does the three masked sequence sums at once;
    # bf16 operands, exact f32 accumulation.
    sums = jnp.einsum('bks,bsh->bkh', masks, hs,
                      preferred_element_type=jnp.float32)       # (tb, 3, H) f32

    # Exact, clamped reciprocals are precomputed on the host (tiny (tb,3) f32).
    feats = sums * inv_ref[...][:, :, None]                     # (tb, 3, H)

    img_feat = feats[:, 0, :]       # mean over token_type_ids == 1
    text_feat = feats[:, 1, :]      # mean over token_type_ids == 2
    mean_feat = feats[:, 2, :]      # mean over attention mask

    # Four accumulated MXU dots against host-packed (H, Lpad) weight slabs.
    # Column layout of the packed output: [logits | img_logits | text_logits | 0-pad]
    out = jnp.dot(pool, w_ref[0], preferred_element_type=jnp.float32)
    out += jnp.dot(mean_feat, w_ref[1], preferred_element_type=jnp.float32)
    out += jnp.dot(img_feat, w_ref[2], preferred_element_type=jnp.float32)
    out += jnp.dot(text_feat, w_ref[3], preferred_element_type=jnp.float32)
    out_ref[...] = out + b_ref[...]


# --------------------------- host-side packing ------------------------------

def pack_vitbert_head_params(wc, bc, wi, bi, wt, bt, hidden_size, num_labels):
    """Pack the three classifiers into one (4, H, Lpad) weight + (1, Lpad) bias.

    Row layout:   [pool | mean_feat | img_feat | text_feat]
    Column layout:[logits | img_logits | text_logits | zero-pad]
    Call once (weights are static across forward calls)."""
    H, L = hidden_size, num_labels
    Lpad = _round_up(3 * L, 128)                 # lane-dense packed output width
    w = jnp.zeros((4, H, Lpad), jnp.float32)
    w = w.at[0, :, 0:L].set(wc[:H])              # pool      -> logits
    w = w.at[0, :, L:2 * L].set(wi[:H])          # pool      -> img_logits
    w = w.at[1, :, 0:L].set(wc[H:])              # mean_feat -> logits
    w = w.at[2, :, L:2 * L].set(wi[H:])          # img_feat  -> img_logits
    w = w.at[3, :, 2 * L:3 * L].set(wt)          # text_feat -> text_logits
    b = jnp.zeros((1, Lpad), jnp.float32)
    b = b.at[:, 0:L].set(bc).at[:, L:2 * L].set(bi).at[:, 2 * L:3 * L].set(bt)
    return w, b


# ------------------------------ wrapper --------------------------------------

def vitbert_head(text_hidden, pool_output, text_attention, token_type_ids,
                 w_packed, b_packed, num_labels, *, batch_tile=None):
    """Masked mean pooling + the three VitBert classifiers, one pallas_call.

    Returns (logits, img_logits, text_logits), each (B, num_labels)."""
    B, S, H = text_hidden.shape
    L = num_labels
    Lpad = w_packed.shape[-1]
    assert w_packed.shape == (4, H, Lpad) and Lpad >= 3 * L and Lpad % 128 == 0

    tb = _pick_batch_tile(B, S, H) if batch_tile is None else min(batch_tile, B)
    assert B % tb == 0 and (tb == B or tb % 8 == 0), (
        "batch tile must divide B and be a multiple of 8 when smaller than B")
    nb = B // tb

    # Host-side mask / normalizer prep (tiny, O(B*S)).
    att = text_attention.astype(jnp.float32)
    m1 = (token_type_ids == 1).astype(jnp.float32)
    m2 = (token_type_ids == 2).astype(jnp.float32)
    counts = jnp.stack([m1.sum(-1), m2.sum(-1), att.sum(-1)], axis=-1)  # (B,3)
    inv = 1.0 / jnp.maximum(counts, 1.0)          # exact division, clamped
    masks = jnp.stack([m1, m2, att], axis=1).astype(jnp.bfloat16)       # (B,3,S)

    # bf16 on the dominant HBM stream; accumulation stays f32 in-kernel.
    hs = text_hidden.astype(jnp.bfloat16)
    pool = pool_output.astype(jnp.float32)

    # VMEM budget: double-buffered streamed blocks + single-buffered weights.
    est = (2 * (_block_bytes((tb, 3, S), 2) + _block_bytes((tb, S, H), 2)
                + _block_bytes((tb, H), 4) + _block_bytes((tb, 3), 4)
                + _block_bytes((tb, Lpad), 4))
           + _block_bytes((4, H, Lpad), 4) + _block_bytes((1, Lpad), 4))
    vmem_limit = int(min(max(est + (8 << 20), 32 << 20), 96 << 20))

    packed = pl.pallas_call(
        vitbert_head_kernel,
        out_shape=jax.ShapeDtypeStruct((B, Lpad), jnp.float32),
        grid=(nb,),
        in_specs=[
            pl.BlockSpec((tb, 3, S), lambda i: (i, 0, 0)),        # masks (bf16 0/1)
            pl.BlockSpec((tb, S, H), lambda i: (i, 0, 0)),        # hidden states (bf16)
            pl.BlockSpec((tb, H), lambda i: (i, 0)),              # ViT pooled output
            pl.BlockSpec((tb, 3), lambda i: (i, 0)),              # exact 1/counts
            pl.BlockSpec((4, H, Lpad), lambda i: (0, 0, 0),
                         pipeline_mode=pl.Buffered(1)),           # packed weight (resident)
            pl.BlockSpec((1, Lpad), lambda i: (0, 0),
                         pipeline_mode=pl.Buffered(1)),           # packed bias (resident)
        ],
        out_specs=pl.BlockSpec((tb, Lpad), lambda i: (i, 0)),     # lane-dense packed out
        compiler_params=pltpu.CompilerParams(
            dimension_semantics=("parallel",),   # v7x megacore (needs nb >= 2)
            vmem_limit_bytes=vmem_limit),
    )(masks, hs, pool, inv, w_packed, b_packed)

    return packed[:, 0:L], packed[:, L:2 * L], packed[:, 2 * L:3 * L]


# --------------------------- plain-JAX glue ---------------------------------

def synthetic_bert(text_ids, token_type_ids, word_emb, type_emb, pos_emb):
    # TODO(synk): the full pretrained BERT transformer encoder has no clean
    # Pallas equivalent here; stand-in = deterministic embedding sum -> (B,S,H).
    S = text_ids.shape[1]
    return word_emb[text_ids] + type_emb[token_type_ids] + pos_emb[None, :S, :]


def synthetic_vit(pixel_values, w_proj, b_proj):
    # TODO(synk): the full pretrained ViT encoder has no clean Pallas
    # equivalent here; stand-in = flatten(NCHW) + linear + tanh "pooler" -> (B,H).
    B = pixel_values.shape[0]
    flat = pixel_values.reshape(B, -1)
    return jnp.tanh(flat @ w_proj + b_proj)


# ------------------------------- main ---------------------------------------

if __name__ == "__main__":
    B, S, H, L = 2, 8, 32, 4        # batch, seq, hidden_size, num_labels
    C, P = 3, 16                    # image channels / spatial
    VOCAB, TYPE_VOCAB = 50, 4       # bert.config.type_vocab_size = 4

    key = jax.random.PRNGKey(0)
    ks = jax.random.split(key, 12)

    # deterministic "pretrained" stand-in parameters
    word_emb = 0.02 * jax.random.normal(ks[0], (VOCAB, H), jnp.float32)
    type_emb = 0.02 * jax.random.normal(ks[1], (TYPE_VOCAB, H), jnp.float32)
    pos_emb = 0.02 * jax.random.normal(ks[2], (S, H), jnp.float32)
    w_vit = 0.02 * jax.random.normal(ks[3], (C * P * P, H), jnp.float32)
    b_vit = jnp.zeros((H,), jnp.float32)

    # VitBert head parameters (nn.Linear shapes from __init__)
    wc = 0.02 * jax.random.normal(ks[4], (2 * H, L), jnp.float32)
    bc = 0.02 * jax.random.normal(ks[5], (1, L), jnp.float32)
    wi = 0.02 * jax.random.normal(ks[6], (2 * H, L), jnp.float32)
    bi = 0.02 * jax.random.normal(ks[7], (1, L), jnp.float32)
    wt = 0.02 * jax.random.normal(ks[8], (H, L), jnp.float32)
    bt = 0.02 * jax.random.normal(ks[9], (1, L), jnp.float32)

    # inputs (shapes as the PyTorch forward implies)
    text = jax.random.randint(ks[10], (B, S), 0, VOCAB, jnp.int32)
    # each row contains type-1 and type-2 tokens so the masked means are defined
    token_type_ids = jnp.tile(
        jnp.array([0, 1, 1, 1, 2, 2, 2, 0], jnp.int32)[None, :], (B, 1))
    text_attention = jnp.ones((B, S), jnp.float32)
    vilt_img = jax.random.normal(ks[11], (B, C, P, P), jnp.float32)  # NCHW

    # stand-in encoders (glue)
    text_hidden = synthetic_bert(text, token_type_ids, word_emb, type_emb, pos_emb)
    pool_output = synthetic_vit(vilt_img, w_vit, b_vit)

    # pack the classifiers ONCE (static across calls), then run the kernel
    w_packed, b_packed = pack_vitbert_head_params(wc, bc, wi, bi, wt, bt, H, L)
    logits, img_logits, text_logits = vitbert_head(
        text_hidden, pool_output, text_attention, token_type_ids,
        w_packed, b_packed, L)
    jax.block_until_ready((logits, img_logits, text_logits))

    # plain-JAX f32 reference (exact division, separate matmuls).  The only
    # kernel-side approximation left is the bf16 cast of the hidden states,
    # so a 1e-3 tolerance is comfortable at these magnitudes.
    m1 = (token_type_ids == 1).astype(jnp.float32)
    m2 = (token_type_ids == 2).astype(jnp.float32)
    img_f = jnp.sum(text_hidden * m1[:, :, None], 1) / jnp.sum(m1, 1)[:, None]
    txt_f = jnp.sum(text_hidden * m2[:, :, None], 1) / jnp.sum(m2, 1)[:, None]
    mean_f = (jnp.sum(text_hidden * text_attention[:, :, None], 1)
              / jnp.sum(text_attention, 1)[:, None])
    ref_logits = jnp.concatenate([pool_output, mean_f], -1) @ wc + bc
    ref_img = jnp.concatenate([pool_output, img_f], -1) @ wi + bi
    ref_txt = txt_f @ wt + bt
    assert jnp.allclose(logits, ref_logits, atol=1e-3)
    assert jnp.allclose(img_logits, ref_img, atol=1e-3)
    assert jnp.allclose(text_logits, ref_txt, atol=1e-3)

    print("KERNEL_OK")
</pallas_src>

<mosaic_0001>
module attributes {stable_mosaic.version = 11 : i64} {
  func.func @vitbert_head_kernel(%arg0: i32, %arg1: memref<2x3x8xbf16, #tpu.memory_space<vmem>>, %arg2: memref<2x8x32xbf16, #tpu.memory_space<vmem>>, %arg3: memref<2x32xf32, #tpu.memory_space<vmem>>, %arg4: memref<2x3xf32, #tpu.memory_space<vmem>>, %arg5: memref<4x32x128xf32, #tpu.memory_space<vmem>>, %arg6: memref<1x128xf32, #tpu.memory_space<vmem>>, %arg7: memref<2x128xf32, #tpu.memory_space<vmem>>) attributes {dimension_semantics = [#tpu.dimension_semantics<parallel>], iteration_bounds = array<i64: 1>, scalar_prefetch = 0 : i64, scratch_operands = 0 : i64, tpu.core_type = #tpu.core_type<tc>, window_params = [{transform_indices = @transform_0, window_bounds = array<i64: 2, 3, 8>}, {transform_indices = @transform_1, window_bounds = array<i64: 2, 8, 32>}, {transform_indices = @transform_2, window_bounds = array<i64: 2, 32>}, {transform_indices = @transform_3, window_bounds = array<i64: 2, 3>}, {pipeline_mode = #tpu.pipeline_mode<synchronous>, transform_indices = @transform_4, window_bounds = array<i64: 4, 32, 128>}, {pipeline_mode = #tpu.pipeline_mode<synchronous>, transform_indices = @transform_5, window_bounds = array<i64: 1, 128>}, {transform_indices = @transform_6, window_bounds = array<i64: 2, 128>}]} {
    %c0 = arith.constant 0 : index
    %c0_0 = arith.constant 0 : index
    %c0_1 = arith.constant 0 : index
    %0 = vector.load %arg1[%c0, %c0_0, %c0_1] : memref<2x3x8xbf16, #tpu.memory_space<vmem>>, vector<2x3x8xbf16>
    %c0_2 = arith.constant 0 : index
    %c0_3 = arith.constant 0 : index
    %c0_4 = arith.constant 0 : index
    %1 = vector.load %arg2[%c0_2, %c0_3, %c0_4] : memref<2x8x32xbf16, #tpu.memory_space<vmem>>, vector<2x8x32xbf16>
    %c0_5 = arith.constant 0 : index
    %c0_6 = arith.constant 0 : index
    %2 = vector.load %arg3[%c0_5, %c0_6] : memref<2x32xf32, #tpu.memory_space<vmem>>, vector<2x32xf32>
    "tpu.trace_start"() <{level = 10 : i32, message = "bks,bsh->bkh"}> : () -> ()
    %cst = arith.constant dense<0.000000e+00> : vector<2x3x32xf32>
    %3 = tpu.matmul %0, %1, %cst {dimension_numbers = #tpu.dot_dimension_numbers<[2], [1], [1], [2], [0, 0, 0, 1, 1, 2], [0], [0]>} : vector<2x3x8xbf16>, vector<2x8x32xbf16>, vector<2x3x32xf32> -> vector<2x3x32xf32>
    "tpu.trace_stop"() : () -> ()
    %c0_7 = arith.constant 0 : index
    %c0_8 = arith.constant 0 : index
    %4 = vector.load %arg4[%c0_7, %c0_8] : memref<2x3xf32, #tpu.memory_space<vmem>>, vector<2x3xf32>
    %5 = vector.shape_cast %4 : vector<2x3xf32> to vector<2x3x1xf32>
    %6 = vector.broadcast %5 : vector<2x3x1xf32> to vector<2x3x32xf32>
    %7 = arith.mulf %3, %6 : vector<2x3x32xf32>
    %8 = vector.extract_strided_slice %7 {offsets = [0, 0, 0], sizes = [2, 1, 32], strides = [1, 1, 1]} : vector<2x3x32xf32> to vector<2x1x32xf32>
    %9 = vector.shape_cast %8 : vector<2x1x32xf32> to vector<2x32xf32>
    %10 = vector.extract_strided_slice %7 {offsets = [0, 1, 0], sizes = [2, 1, 32], strides = [1, 1, 1]} : vector<2x3x32xf32> to vector<2x1x32xf32>
    %11 = vector.shape_cast %10 : vector<2x1x32xf32> to vector<2x32xf32>
    %12 = vector.extract_strided_slice %7 {offsets = [0, 2, 0], sizes = [2, 1, 32], strides = [1, 1, 1]} : vector<2x3x32xf32> to vector<2x1x32xf32>
    %13 = vector.shape_cast %12 : vector<2x1x32xf32> to vector<2x32xf32>
    %c0_9 = arith.constant 0 : index
    %c0_10 = arith.constant 0 : index
    %c0_11 = arith.constant 0 : index
    %14 = vector.load %arg5[%c0_9, %c0_10, %c0_11] : memref<4x32x128xf32, #tpu.memory_space<vmem>>, vector<1x32x128xf32>
    %15 = vector.shape_cast %14 : vector<1x32x128xf32> to vector<32x128xf32>
    %cst_12 = arith.constant dense<0.000000e+00> : vector<2x128xf32>
    %16 = tpu.matmul %2, %15, %cst_12 {dimension_numbers = #tpu.dot_dimension_numbers<[1], [0], [0], [1], [0, 0, 1, 1], [], []>} : vector<2x32xf32>, vector<32x128xf32>, vector<2x128xf32> -> vector<2x128xf32>
    %c1 = arith.constant 1 : index
    %c0_13 = arith.constant 0 : index
    %c0_14 = arith.constant 0 : index
    %17 = vector.load %arg5[%c1, %c0_13, %c0_14] : memref<4x32x128xf32, #tpu.memory_space<vmem>>, vector<1x32x128xf32>
    %18 = vector.shape_cast %17 : vector<1x32x128xf32> to vector<32x128xf32>
    %cst_15 = arith.constant dense<0.000000e+00> : vector<2x128xf32>
    %19 = tpu.matmul %13, %18, %cst_15 {dimension_numbers = #tpu.dot_dimension_numbers<[1], [0], [0], [1], [0, 0, 1, 1], [], []>} : vector<2x32xf32>, vector<32x128xf32>, vector<2x128xf32> -> vector<2x128xf32>
    %20 = arith.addf %16, %19 : vector<2x128xf32>
    %c2 = arith.constant 2 : index
    %c0_16 = arith.constant 0 : index
    %c0_17 = arith.constant 0 : index
    %21 = vector.load %arg5[%c2, %c0_16, %c0_17] : memref<4x32x128xf32, #tpu.memory_space<vmem>>, vector<1x32x128xf32>
    %22 = vector.shape_cast %21 : vector<1x32x128xf32> to vector<32x128xf32>
    %cst_18 = arith.constant dense<0.000000e+00> : vector<2x128xf32>
    %23 = tpu.matmul %9, %22, %cst_18 {dimension_numbers = #tpu.dot_dimension_numbers<[1], [0], [0], [1], [0, 0, 1, 1], [], []>} : vector<2x32xf32>, vector<32x128xf32>, vector<2x128xf32> -> vector<2x128xf32>
    %24 = arith.addf %20, %23 : vector<2x128xf32>
    %c3 = arith.constant 3 : index
    %c0_19 = arith.constant 0 : index
    %c0_20 = arith.constant 0 : index
    %25 = vector.load %arg5[%c3, %c0_19, %c0_20] : memref<4x32x128xf32, #tpu.memory_space<vmem>>, vector<1x32x128xf32>
    %26 = vector.shape_cast %25 : vector<1x32x128xf32> to vector<32x128xf32>
    %cst_21 = arith.constant dense<0.000000e+00> : vector<2x128xf32>
    %27 = tpu.matmul %11, %26, %cst_21 {dimension_numbers = #tpu.dot_dimension_numbers<[1], [0], [0], [1], [0, 0, 1, 1], [], []>} : vector<2x32xf32>, vector<32x128xf32>, vector<2x128xf32> -> vector<2x128xf32>
    %28 = arith.addf %24, %27 : vector<2x128xf32>
    %c0_22 = arith.constant 0 : index
    %c0_23 = arith.constant 0 : index
    %29 = vector.load %arg6[%c0_22, %c0_23] : memref<1x128xf32, #tpu.memory_space<vmem>>, vector<1x128xf32>
    %30 = vector.broadcast %29 : vector<1x128xf32> to vector<2x128xf32>
    %31 = arith.addf %28, %30 : vector<2x128xf32>
    %c0_24 = arith.constant 0 : index
    %c0_25 = arith.constant 0 : index
    %32 = vector.load %arg7[%c0_24, %c0_25] : memref<2x128xf32, #tpu.memory_space<vmem>>, vector<2x128xf32>
    tpu.vector_store %arg7[%c0_24, %c0_25], %31 {strides = array<i32>} : memref<2x128xf32, #tpu.memory_space<vmem>>, vector<2x128xf32>,
    return
  }
  func.func @transform_0(%arg0: i32) -> (i32, i32, i32) {
    %c0_i32 = arith.constant 0 : i32
    %c0_i32_0 = arith.constant 0 : i32
    %c0_i32_1 = arith.constant 0 : i32
    return %arg0, %c0_i32, %c0_i32_0 : i32, i32, i32
  }
  func.func @transform_1(%arg0: i32) -> (i32, i32, i32) {
    %c0_i32 = arith.constant 0 : i32
    %c0_i32_0 = arith.constant 0 : i32
    %c0_i32_1 = arith.constant 0 : i32
    return %arg0, %c0_i32, %c0_i32_0 : i32, i32, i32
  }
  func.func @transform_2(%arg0: i32) -> (i32, i32) {
    %c0_i32 = arith.constant 0 : i32
    %c0_i32_0 = arith.constant 0 : i32
    return %arg0, %c0_i32 : i32, i32
  }
  func.func @transform_3(%arg0: i32) -> (i32, i32) {
    %c0_i32 = arith.constant 0 : i32
    %c0_i32_0 = arith.constant 0 : i32
    return %arg0, %c0_i32 : i32, i32
  }
  func.func @transform_4(%arg0: i32) -> (i32, i32, i32) {
    %c0_i32 = arith.constant 0 : i32
    %c0_i32_0 = arith.constant 0 : i32
    %c0_i32_1 = arith.constant 0 : i32
    %c0_i32_2 = arith.constant 0 : i32
    return %c0_i32, %c0_i32_0, %c0_i32_1 : i32, i32, i32
  }
  func.func @transform_5(%arg0: i32) -> (i32, i32) {
    %c0_i32 = arith.constant 0 : i32
    %c0_i32_0 = arith.constant 0 : i32
    %c0_i32_1 = arith.constant 0 : i32
    return %c0_i32, %c0_i32_0 : i32, i32
  }
  func.func @transform_6(%arg0: i32) -> (i32, i32) {
    %c0_i32 = arith.constant 0 : i32
    %c0_i32_0 = arith.constant 0 : i32
    return %arg0, %c0_i32 : i32, i32
  }
}

</mosaic_0001>

<llo_original>
// kernel: tpu_custom_call.1
$region0: #{tpu_custom_call.1}
  #allocation0 [shape = 'u32[]', space=smem, size = 0x4, offset = 0x4, fixed_abs, tag = 'smem constant byte address 0x4 - core index']
  #allocation1 [shape = 'u32[72,128]{1,0:T(1,128)}', space=vmem, size = 0x9000, scoped, tag = 'internal scratch']
  %s0 = inlined_call_operand.vmem [shape: bf16[2,3,8], index: 0, kind: input, shape index: {}]
  %s1 = inlined_call_operand.hbm [shape: bf16[2,8,32], index: 1, kind: input, shape index: {}]
  %s2 = inlined_call_operand.vmem [shape: f32[2,32], index: 2, kind: input, shape index: {}]
  %s3 = inlined_call_operand.vmem [shape: f32[2,3], index: 3, kind: input, shape index: {}]
  %s4 = inlined_call_operand.hbm [shape: f32[4,32,128], index: 4, kind: input, shape index: {}]
  %s5 = inlined_call_operand.vmem [shape: f32[1,128], index: 5, kind: input, shape index: {}]
  %s6 = inlined_call_operand.hbm [shape: f32[2,128], index: 6, kind: output, shape index: {}]
  %s7 = sld [smem:[#allocation0]]
  $region42: #{tpu_custom_call.1} parent=0
    _
  %s9 = ssub.s32 1, %s7
  %s10 = scalar_select 0, %s9, %s7
  $region1: #{tpu_custom_call.1} parent=0
    #allocation2 [shape = 'u8[4096]{0}', space=vmem, size = 0x1000, scoped, tag = 'input window, operand 1, single buffered']
    #allocation3 [shape = 's32[1]{0}', space=sflag, size = 0x4, scoped, tag = 'scoped memory for tpu_custom_call.1']
    #allocation4 [shape = 's32[1]{0}', space=sflag, size = 0x4, scoped, tag = 'scoped memory for tpu_custom_call.1']
    #allocation5 [shape = 'u8[65536]{0}', space=vmem, size = 0x10000, scoped, tag = 'input window, operand 4, single buffered']
    #allocation6 [shape = 's32[1]{0}', space=sflag, size = 0x4, scoped, tag = 'scoped memory for tpu_custom_call.1']
    #allocation7 [shape = 'u8[1024]{0}', space=vmem, size = 0x400, scoped, tag = 'output window, operand 0, single buffered']
    %11 = vsyncpa [#allocation3], 0
    %12 = vsyncpa [#allocation6], 0
    %13 = vsyncpa [#allocation4], 0
    // Predicated region
    $region2: #{tpu_custom_call.1} parent=1 // pred_check
      _
    $region3: #{tpu_custom_call.1} parent=1 // pred_check_branch
      %15 = sbr.rel (0) target = $region5
    $region4: #{tpu_custom_call.1} parent=1 // pred_region
      _
    $region5: #{tpu_custom_call.1} parent=1 // pred_fallthru
      _
    // Predicated region
    $region6: #{tpu_custom_call.1} parent=1 // pred_check
      _
    $region7: #{tpu_custom_call.1} parent=1 // pred_check_branch
      %17 = sbr.rel (0) target = $region9
    $region8: #{tpu_custom_call.1} parent=1 // pred_region
      %19 = vsyncadd [#allocation3], 0
      %s20 = sshll.u32 %s1, 4
      %s21 = int_to_ptr.hbm [resolvable:$true] %s20
      %s22 = sshll.u32 [#allocation2], 4
      %s23 = int_to_ptr.vmem [resolvable:$true] %s22
      %28 = dma.hbm_to_vmem [thread:$0]  %s21, 128, %s23, [#allocation3], 64, 64, 4
    $region9: #{tpu_custom_call.1} parent=1 // pred_fallthru
      _
    // Predicated region
    $region10: #{tpu_custom_call.1} parent=1 // pred_check
      _
    $region11: #{tpu_custom_call.1} parent=1 // pred_check_branch
      %30 = sbr.rel (0) target = $region13
    $region12: #{tpu_custom_call.1} parent=1 // pred_region
      _
    $region13: #{tpu_custom_call.1} parent=1 // pred_fallthru
      _
    // Predicated region
    $region14: #{tpu_custom_call.1} parent=1 // pred_check
      _
    $region15: #{tpu_custom_call.1} parent=1 // pred_check_branch
      %32 = sbr.rel (0) target = $region17
    $region16: #{tpu_custom_call.1} parent=1 // pred_region
      _
    $region17: #{tpu_custom_call.1} parent=1 // pred_fallthru
      _
    // Predicated region
    $region18: #{tpu_custom_call.1} parent=1 // pred_check
      _
    $region19: #{tpu_custom_call.1} parent=1 // pred_check_branch
      %34 = sbr.rel (0) target = $region21
    $region20: #{tpu_custom_call.1} parent=1 // pred_region
      %36 = vsyncadd [#allocation6], 0
      %s37 = sshll.u32 %s4, 4
      %s38 = int_to_ptr.hbm [resolvable:$true] %s37
      %s39 = sshll.u32 [#allocation5], 4
      %s40 = int_to_ptr.vmem [resolvable:$true] %s39
      %45 = dma.hbm_to_vmem [thread:$0]  %s38, 2048, %s40, [#allocation6], 128, 128, 8
    $region21: #{tpu_custom_call.1} parent=1 // pred_fallthru
      _
    // Predicated region
    $region22: #{tpu_custom_call.1} parent=1 // pred_check
      _
    $region23: #{tpu_custom_call.1} parent=1 // pred_check_branch
      %47 = sbr.rel (0) target = $region25
    $region24: #{tpu_custom_call.1} parent=1 // pred_region
      _
    $region25: #{tpu_custom_call.1} parent=1 // pred_fallthru
      _
    // Predicated region
    $region26: #{tpu_custom_call.1} parent=1 // pred_check
      _
    $region27: #{tpu_custom_call.1} parent=1 // pred_check_branch
      %49 = sbr.rel (0) target = $region29
    $region28: #{tpu_custom_call.1} parent=1 // pred_region
      %51 = dma.done [#allocation3], 128
    $region29: #{tpu_custom_call.1} parent=1 // pred_fallthru
      _
    // Predicated region
    $region30: #{tpu_custom_call.1} parent=1 // pred_check
      _
    $region31: #{tpu_custom_call.1} parent=1 // pred_check_branch
      %53 = sbr.rel (0) target = $region33
    $region32: #{tpu_custom_call.1} parent=1 // pred_region
      %55 = dma.done [#allocation6], 2048
    $region33: #{tpu_custom_call.1} parent=1 // pred_fallthru
      _
    %v57 = vld [vmem:[%s0] sm:$0x3]
    %v58 = vld [vmem:[%s0 + $0x2] sm:$0x3]
    %v59 = vld [vmem:[#allocation2] sm:$0xf]
    %v60 = vld [vmem:[#allocation2 + $0x4] sm:$0xf]
    %v61 = vld [vmem:[%s2] sm:$0x3]
    %vm62 = vcmask 64512
    %v64 = vsel %vm62, %v57, 0
    %vm66 = vcmask 1043456
    %v68 = vsel %vm66, %v59, 0
    %70 = vmatpush.bf16.msra.mxu0 0
    %71 = vmatpush.bf16.msra.mxu0 0
    %72 = vmatpush.bf16.msra.mxu0 0
    %73 = vmatpush.bf16.msra.mxu0 0
    %74 = vmatpush.bf16.msra.mxu0 0
    %75 = vmatpush.bf16.msra.mxu0 0
    %76 = vmatpush.bf16.msra.mxu0 0
    %77 = vmatpush.bf16.msra.mxu0 %v68
    %78 = vmatmul.bf16.gmra.mxu0 %v64
    %v79 = vpop.f32.mrf.mxu0
    %v80 = vadd.f32 0.0, %v79
    %v81 = vpop.f32.mrf.mxu0
    %82 = vdwg.mxu0
    %v84 = vsel %vm62, %v58, 0
    %v87 = vsel %vm66, %v60, 0
    %89 = vmatpush.bf16.msra.mxu0 0
    %90 = vmatpush.bf16.msra.mxu0 0
    %91 = vmatpush.bf16.msra.mxu0 0
    %92 = vmatpush.bf16.msra.mxu0 0
    %93 = vmatpush.bf16.msra.mxu0 0
    %94 = vmatpush.bf16.msra.mxu0 0
    %95 = vmatpush.bf16.msra.mxu0 0
    %96 = vmatpush.bf16.msra.mxu0 %v87
    %97 = vmatmul.bf16.gmra.mxu0 %v84
    %v98 = vpop.f32.mrf.mxu0
    %v99 = vadd.f32 0.0, %v98
    %v100 = vpop.f32.mrf.mxu0
    %101 = vdwg.mxu0
    %v102 = vld [vmem:[%s3] sm:$0x3]
    %v103 = vperm.slane %v102, 0
    %v104 = vlaneseq
    %v105 = vshrl.u32 %v104, 7
    %107 = vset.pattern.permute.xlu0 %v105
    %108 = vperm.xlu0 %107, %v103
    %v109 = vpop.permute.xlu0 %108
    %v110 = vperm.slane %v102, 1
    %v111 = vlaneseq
    %v112 = vshrl.u32 %v111, 7
    %114 = vset.pattern.permute.xlu0 %v112
    %115 = vperm.xlu0 %114, %v110
    %v116 = vpop.permute.xlu0 %115
    %v117 = vmul.f32 %v80, %v109
    %v118 = vmul.f32 %v99, %v116
    %v119 = vld [vmem:[#allocation5] sm:$0xff]
    %v120 = vld [vmem:[#allocation5 + $0x8] sm:$0xff]
    %v121 = vld [vmem:[#allocation5 + $0x10] sm:$0xff]
    %v122 = vld [vmem:[#allocation5 + $0x18] sm:$0xff]
    %s123 = scalar_lea.vmem [#allocation5], 32
    %v124 = vld [vmem:[%s123] sm:$0xff]
    %v125 = vld [vmem:[%s123 + $0x8] sm:$0xff]
    %v126 = vld [vmem:[%s123 + $0x10] sm:$0xff]
    %v127 = vld [vmem:[%s123 + $0x18] sm:$0xff]
    %v130 = vrot.slane %v117, 2
    %v131 = vrot.slane %v118, 1
    %vm132 = vcmask 1041409
    %v133 = vsel %vm132, %v131, %v130
    %vm134 = vcmask 261120
    %v135 = vsel %vm134, %v133, 0
    %137 = vmatpush.msra.mxu0 0.0
    %138 = vmatpush.msra.mxu0 0.0
    %139 = vmatpush.msra.mxu0 0.0
    %140 = vmatpush.msra.mxu0 0.0
    %141 = vmatpush.msra.mxu0 0.0
    %142 = vmatpush.msra.mxu0 0.0
    %143 = vmatpush.msra.mxu0 0.0
    %144 = vmatpush.msra.mxu0 0.0
    %145 = vmatpush.msra.mxu0 0.0
    %146 = vmatpush.msra.mxu0 0.0
    %147 = vmatpush.msra.mxu0 0.0
    %148 = vmatpush.msra.mxu0 0.0
    %149 = vmatpush.msra.mxu0 %v127
    %150 = vmatpush.msra.mxu0 %v126
    %151 = vmatpush.msra.mxu0 %v125
    %152 = vmatpush.msra.mxu0 %v124
    %153 = vmatmul.f32.gmra.mxu0 %v135
    %v154 = vpop.f32.mrf.mxu0
    %v155 = vadd.f32 0.0, %v154
    %156 = vdwg.mxu0
    %v158 = vsel %vm134, %v61, 0
    %160 = vmatpush.msra.mxu0 0.0
    %161 = vmatpush.msra.mxu0 0.0
    %162 = vmatpush.msra.mxu0 0.0
    %163 = vmatpush.msra.mxu0 0.0
    %164 = vmatpush.msra.mxu0 0.0
    %165 = vmatpush.msra.mxu0 0.0
    %166 = vmatpush.msra.mxu0 0.0
    %167 = vmatpush.msra.mxu0 0.0
    %168 = vmatpush.msra.mxu0 0.0
    %169 = vmatpush.msra.mxu0 0.0
    %170 = vmatpush.msra.mxu0 0.0
    %171 = vmatpush.msra.mxu0 0.0
    %172 = vmatpush.msra.mxu0 %v122
    %173 = vmatpush.msra.mxu0 %v121
    %174 = vmatpush.msra.mxu0 %v120
    %175 = vmatpush.msra.mxu0 %v119
    %176 = vmatmul.f32.gmra.mxu0 %v158
    %v177 = vpop.f32.mrf.mxu0
    %v178 = vadd.f32 %v155, %v177
    %179 = vdwg.mxu0
    %s180 = scalar_lea.vmem [#allocation5], 64
    %v181 = vld [vmem:[%s180] sm:$0xff]
    %v182 = vld [vmem:[%s180 + $0x8] sm:$0xff]
    %v183 = vld [vmem:[%s180 + $0x10] sm:$0xff]
    %v184 = vld [vmem:[%s180 + $0x18] sm:$0xff]
    %v185 = vrot.slane %v118, 7
    %v186 = vsel %vm132, %v185, %v117
    %v187 = vsel %vm134, %v186, 0
    %189 = vmatpush.msra.mxu0 0.0
    %190 = vmatpush.msra.mxu0 0.0
    %191 = vmatpush.msra.mxu0 0.0
    %192 = vmatpush.msra.mxu0 0.0
    %193 = vmatpush.msra.mxu0 0.0
    %194 = vmatpush.msra.mxu0 0.0
    %195 = vmatpush.msra.mxu0 0.0
    %196 = vmatpush.msra.mxu0 0.0
    %197 = vmatpush.msra.mxu0 0.0
    %198 = vmatpush.msra.mxu0 0.0
    %199 = vmatpush.msra.mxu0 0.0
    %200 = vmatpush.msra.mxu0 0.0
    %201 = vmatpush.msra.mxu0 %v184
    %202 = vmatpush.msra.mxu0 %v183
    %203 = vmatpush.msra.mxu0 %v182
    %204 = vmatpush.msra.mxu0 %v181
    %205 = vmatmul.f32.gmra.mxu0 %v187
    %v206 = vpop.f32.mrf.mxu0
    %v207 = vadd.f32 0.0, %v206
    %208 = vdwg.mxu0
    %v209 = vadd.f32 %v178, %v207
    %s210 = scalar_lea.vmem [#allocation5], 96
    %v211 = vld [vmem:[%s210] sm:$0xff]
    %v212 = vld [vmem:[%s210 + $0x8] sm:$0xff]
    %v213 = vld [vmem:[%s210 + $0x10] sm:$0xff]
    %v214 = vld [vmem:[%s210 + $0x18] sm:$0xff]
    %v215 = vrot.slane %v117, 1
    %v216 = vsel %vm132, %v118, %v215
    %v217 = vsel %vm134, %v216, 0
    %219 = vmatpush.msra.mxu0 0.0
    %220 = vmatpush.msra.mxu0 0.0
    %221 = vmatpush.msra.mxu0 0.0
    %222 = vmatpush.msra.mxu0 0.0
    %223 = vmatpush.msra.mxu0 0.0
    %224 = vmatpush.msra.mxu0 0.0
    %225 = vmatpush.msra.mxu0 0.0
    %226 = vmatpush.msra.mxu0 0.0
    %227 = vmatpush.msra.mxu0 0.0
    %228 = vmatpush.msra.mxu0 0.0
    %229 = vmatpush.msra.mxu0 0.0
    %230 = vmatpush.msra.mxu0 0.0
    %231 = vmatpush.msra.mxu0 %v214
    %232 = vmatpush.msra.mxu0 %v213
    %233 = vmatpush.msra.mxu0 %v212
    %234 = vmatpush.msra.mxu0 %v211
    %235 = vmatmul.f32.gmra.mxu0 %v217
    %v236 = vpop.f32.mrf.mxu0
    %v237 = vadd.f32 0.0, %v236
    %238 = vdwg.mxu0
    %v239 = vadd.f32 %v209, %v237
    %v240 = vld [vmem:[%s5] sm:$0x1]
    %v242 = vperm.slane %v240, 0
    %v244 = vadd.f32 %v239, %v242
    %245 = vst [vmem:[#allocation7] sm:$0x3] %v244
    // Predicated region
    $region34: #{tpu_custom_call.1} parent=1 // pred_check
      _
    $region35: #{tpu_custom_call.1} parent=1 // pred_check_branch
      %247 = sbr.rel (0) target = $region37
    $region36: #{tpu_custom_call.1} parent=1 // pred_region
      %249 = vsyncadd [#allocation4], 0
      %s251 = sshll.u32 [#allocation7], 4
      %s252 = int_to_ptr.vmem [resolvable:$true] %s251
      %s253 = sshll.u32 %s6, 4
      %s254 = int_to_ptr.hbm [resolvable:$true] %s253
      %256 = dma.vmem_to_hbm [thread:$0]  %s252, 32, %s254, [#allocation4]
    $region37: #{tpu_custom_call.1} parent=1 // pred_fallthru
      _
    // Predicated region
    $region38: #{tpu_custom_call.1} parent=1 // pred_check
      _
    $region39: #{tpu_custom_call.1} parent=1 // pred_check_branch
      %258 = sbr.rel (0) target = $region41
    $region40: #{tpu_custom_call.1} parent=1 // pred_region
      %260 = dma.done [#allocation4], 32
    $region41: #{tpu_custom_call.1} parent=1 // pred_fallthru
      _
    %261 = vsyncpa [#allocation3], 1
    %262 = vsyncpa [#allocation6], 1
    %263 = vsyncpa [#allocation4], 1

</llo_original>
